<compile_context>
chip_gen: v6e
topology: v6e:2x2x1
jax: 0.10.0
libtpu: 0.0.40
codegen_flags: <defaults>
</compile_context>

<pallas_src>
import jax
import jax.numpy as jnp
import numpy as np
from jax import lax
from jax.experimental import pallas as pl
from jax.experimental.pallas import tpu as pltpu


def _round_up(x, m):
    return -(-x // m) * m


def attn1d_kernel(h_ref, w_ref, b_ref, r_ref, alpha_ref):
    # h_ref:     (Bt, T, C)   VMEM  input block of H
    # w_ref:     (1, C)       VMEM  Linear weight, lane-dense native layout, H.dtype
    # b_ref:     (1,)         SMEM  Linear bias (scalar path, f32)
    # r_ref:     (Bt, Cp)     VMEM  context-vector output block (Cp = round_up(C,128))
    # alpha_ref: (Bt, Tp)     VMEM  attention-weight output block (Tp = round_up(T,128))
    Bt, T, C = h_ref.shape
    Tp = alpha_ref.shape[-1]
    Cp = r_ref.shape[-1]

    H = h_ref[...]                                    # (Bt, T, C), input dtype
    M = jnp.tanh(H)                                   # pointwise (EUP), input dtype

    # Linear(C -> 1) as one MXU contraction over the flattened (Bt*T, C) view.
    # Weight stays in its native (1, C) lane-dense layout; contraction on dim 1
    # (i.e. trans_b). f32 accumulation via preferred_element_type.
    logits = lax.dot_general(
        M.reshape(Bt * T, C), w_ref[...],
        dimension_numbers=(((1,), (1,)), ((), ())),
        preferred_element_type=jnp.float32,
    ).reshape(Bt, T) + b_ref[0]                       # (Bt, T), f32

    # Pad the sequence axis to the lane-dense output width with a very negative
    # value so padded softmax columns are exactly zero after exp().
    if Tp > T:
        logits = jnp.concatenate(
            [logits, jnp.full((Bt, Tp - T), -1e30, dtype=jnp.float32)], axis=1)

    # Numerically stable softmax over the (padded) sequence axis, EXACT division
    # (alpha is a user-visible probability output).
    m = jnp.max(logits, axis=1, keepdims=True)        # (Bt, 1)
    e = jnp.exp(logits - m)                           # (Bt, Tp)
    alpha = e / jnp.sum(e, axis=1, keepdims=True)     # (Bt, Tp), f32

    alpha_t = alpha[:, :T]                            # (Bt, T) real columns

    if T >= 128:
        # Long sequences: batched MXU contraction keeps the (Bt,T,C) product
        # off the VPU (accepting the bf16 quantization of alpha on bf16 inputs).
        p = alpha_t.astype(H.dtype)[:, None, :]       # (Bt, 1, T)
        r = jnp.einsum("bqt,btc->bqc", p, H,
                       preferred_element_type=jnp.float32)[:, 0, :]   # (Bt, C)
    else:
        # Short sequences: q=1 matmuls would use <1% of the MXU; use the VPU
        # multiply + sublane reduce instead, keeping alpha in f32.
        r = jnp.sum(H.astype(jnp.float32) * alpha_t[:, :, None], axis=1)  # (Bt, C)

    if Cp > C:
        r = jnp.concatenate(
            [r, jnp.zeros((Bt, Cp - C), dtype=jnp.float32)], axis=1)

    r_ref[...] = r.astype(r_ref.dtype)
    alpha_ref[...] = alpha.astype(alpha_ref.dtype)


def attention1d(H, weight, bias, *, block_b=None,
                vmem_limit_bytes=48 * 1024 * 1024):
    """H: (B, T, C); weight: (1, C) (PyTorch Linear layout); bias: (1,)."""
    B, T, C = H.shape
    Tp = _round_up(T, 128)    # lane-dense alpha output width
    Cp = _round_up(C, 128)    # lane-dense r output width

    # Keep the weight in H's dtype (bf16 x bf16 -> f32 is the fast MXU path);
    # bias is a single f32 scalar in SMEM.
    w_row = weight.reshape(1, C).astype(H.dtype)
    b_vec = bias.reshape(1).astype(jnp.float32)

    if block_b is None:
        itemsize = jnp.dtype(H.dtype).itemsize
        bytes_per_row = max(1, T * C * itemsize)
        # Real per-step footprint is ~4x the H block (double-buffered H input,
        # tanh(M), f32 temporaries, padded outputs): budget the H block at
        # min(8 MiB, vmem_limit/4) so it never spills while staying large
        # enough to amortize the ~0.35us per-grid-step pipeline overhead.
        per_block_budget = min(8 * 1024 * 1024, vmem_limit_bytes // 4)
        rows = max(1, per_block_budget // bytes_per_row)
        if B <= 8:
            block_b = B
        else:
            # >= 2 grid steps so the "parallel" batch axis has work for both
            # v7x TensorCores; keep the sublane (batch) dim 8-aligned.
            half_b = _round_up(-(-B // 2), 8)
            block_b = max(8, min((rows // 8) * 8, half_b))
        # NOTE: for very long sequences where even 8 rows of (T, C) overflow
        # VMEM, a T grid axis with flash-style online-softmax accumulators
        # would be needed; not required at these sizes.
    block_b = max(1, min(block_b, B))
    grid_b = pl.cdiv(B, block_b)

    r_p, alpha_p = pl.pallas_call(
        attn1d_kernel,
        out_shape=(
            jax.ShapeDtypeStruct((B, Cp), H.dtype),
            jax.ShapeDtypeStruct((B, Tp), jnp.float32),   # alpha stays f32
        ),
        grid_spec=pltpu.PrefetchScalarGridSpec(
            num_scalar_prefetch=0,
            grid=(grid_b,),
            in_specs=[
                # TODO(synk): at real model sizes pad C to a multiple of 128
                # upstream so the H stream is lane-dense (C=32 uses 1/4 lanes).
                pl.BlockSpec((block_b, T, C), lambda i: (i, 0, 0)),
                pl.BlockSpec((1, C), lambda i: (0, 0)),
                pl.BlockSpec(memory_space=pltpu.MemorySpace.SMEM),
            ],
            out_specs=[
                pl.BlockSpec((block_b, Cp), lambda i: (i, 0)),   # unmasked vst
                pl.BlockSpec((block_b, Tp), lambda i: (i, 0)),   # unmasked vst
            ],
        ),
        compiler_params=pltpu.CompilerParams(
            dimension_semantics=("parallel",),   # megacore-shardable batch axis
            vmem_limit_bytes=vmem_limit_bytes,
        ),
    )(H, w_row, b_vec)

    return r_p[:, :C], alpha_p[:, :T]


def attention1d_ref(H, weight, bias):
    Hf = H.astype(jnp.float32)
    M = jnp.tanh(Hf)
    logits = jnp.einsum("btc,oc->bto", M, weight.astype(jnp.float32))[..., 0]
    logits = logits + bias.astype(jnp.float32)[0]
    alpha = jax.nn.softmax(logits, axis=1)
    r = jnp.sum(Hf * alpha[:, :, None], axis=1)
    return r.astype(H.dtype), alpha


if __name__ == "__main__":
    # Small shapes consistent with the module: (batch, seq, in_channel).
    B, T, C = 16, 8, 32

    key = jax.random.PRNGKey(0)
    k_h, k_w, k_b = jax.random.split(key, 3)

    H = jax.random.normal(k_h, (B, T, C), dtype=jnp.float32)

    # Deterministic Linear(C, 1) init mimicking PyTorch default
    # uniform(-1/sqrt(C), 1/sqrt(C)).
    bound = 1.0 / np.sqrt(C)
    weight = jax.random.uniform(k_w, (1, C), minval=-bound, maxval=bound,
                                dtype=jnp.float32)
    bias = jax.random.uniform(k_b, (1,), minval=-bound, maxval=bound,
                              dtype=jnp.float32)

    # Heuristic picks block_b=8 -> 2 grid steps (pipelined, megacore-shardable).
    r, alpha = attention1d(H, weight, bias)
    jax.block_until_ready((r, alpha))

    r_ref, alpha_ref = attention1d_ref(H, weight, bias)
    np.testing.assert_allclose(np.asarray(r), np.asarray(r_ref),
                               rtol=1e-4, atol=1e-4)
    np.testing.assert_allclose(np.asarray(alpha), np.asarray(alpha_ref),
                               rtol=1e-4, atol=1e-4)
    assert r.shape == (B, C) and alpha.shape == (B, T)

    print("KERNEL_OK")
</pallas_src>

<mosaic_0001>
module attributes {stable_mosaic.version = 11 : i64} {
  func.func @attn1d_kernel(%arg0: i32, %arg1: memref<8x8x32xf32, #tpu.memory_space<vmem>>, %arg2: memref<1x32xf32, #tpu.memory_space<vmem>>, %arg3: memref<1xf32, #tpu.memory_space<smem>>, %arg4: memref<8x128xf32, #tpu.memory_space<vmem>>, %arg5: memref<8x128xf32, #tpu.memory_space<vmem>>) attributes {dimension_semantics = [#tpu.dimension_semantics<parallel>], iteration_bounds = array<i64: 2>, scalar_prefetch = 0 : i64, scratch_operands = 0 : i64, tpu.core_type = #tpu.core_type<tc>, window_params = [{transform_indices = @transform_0, window_bounds = array<i64: 8, 8, 32>}, {pipeline_mode = #tpu.pipeline_mode<synchronous>, transform_indices = @transform_1, window_bounds = array<i64: 1, 32>}, {transform_indices = @transform_2, window_bounds = array<i64: 1>}, {transform_indices = @transform_3, window_bounds = array<i64: 8, 128>}, {transform_indices = @transform_4, window_bounds = array<i64: 8, 128>}]} {
    %c0 = arith.constant 0 : index
    %c0_0 = arith.constant 0 : index
    %c0_1 = arith.constant 0 : index
    %0 = vector.load %arg1[%c0, %c0_0, %c0_1] : memref<8x8x32xf32, #tpu.memory_space<vmem>>, vector<8x8x32xf32>
    %1 = math.tanh %0 : vector<8x8x32xf32>
    %2 = vector.shape_cast %1 : vector<8x8x32xf32> to vector<64x32xf32>
    %c0_2 = arith.constant 0 : index
    %c0_3 = arith.constant 0 : index
    %3 = vector.load %arg2[%c0_2, %c0_3] : memref<1x32xf32, #tpu.memory_space<vmem>>, vector<1x32xf32>
    %cst = arith.constant dense<0.000000e+00> : vector<64x1xf32>
    %4 = tpu.matmul %2, %3, %cst {dimension_numbers = #tpu.dot_dimension_numbers<[1], [1], [0], [0], [0, 0, 1, 0], [], []>} : vector<64x32xf32>, vector<1x32xf32>, vector<64x1xf32> -> vector<64x1xf32>
    %5 = vector.shape_cast %4 : vector<64x1xf32> to vector<8x8xf32>
    %c0_4 = arith.constant 0 : index
    %6 = memref.load %arg3[%c0_4] : memref<1xf32, #tpu.memory_space<smem>>
    %7 = vector.broadcast %6 : f32 to vector<8x8xf32>
    %8 = arith.addf %5, %7 : vector<8x8xf32>
    %cst_5 = arith.constant -1.000000e+30 : f32
    %9 = vector.broadcast %cst_5 : f32 to vector<8x120xf32>
    %10 = tpu.concatenate %8, %9 in 1 : vector<8x8xf32>, vector<8x120xf32> -> vector<8x128xf32>
    %cst_6 = arith.constant dense<0xFF800000> : vector<8xf32>
    %11 = vector.multi_reduction <maximumf>, %10, %cst_6 [1] : vector<8x128xf32> to vector<8xf32>
    %12 = vector.shape_cast %11 : vector<8xf32> to vector<8x1xf32>
    %13 = vector.broadcast %12 : vector<8x1xf32> to vector<8x128xf32>
    %14 = arith.subf %10, %13 : vector<8x128xf32>
    %15 = math.exp %14 : vector<8x128xf32>
    %cst_7 = arith.constant dense<0.000000e+00> : vector<8xf32>
    %16 = vector.multi_reduction <add>, %15, %cst_7 [1] : vector<8x128xf32> to vector<8xf32>
    %17 = vector.shape_cast %16 : vector<8xf32> to vector<8x1xf32>
    %18 = vector.broadcast %17 : vector<8x1xf32> to vector<8x128xf32>
    %19 = arith.divf %15, %18 : vector<8x128xf32>
    %20 = vector.extract_strided_slice %19 {offsets = [0, 0], sizes = [8, 8], strides = [1, 1]} : vector<8x128xf32> to vector<8x8xf32>
    %21 = vector.shape_cast %20 : vector<8x8xf32> to vector<8x8x1xf32>
    %22 = vector.broadcast %21 : vector<8x8x1xf32> to vector<8x8x32xf32>
    %23 = arith.mulf %0, %22 : vector<8x8x32xf32>
    %cst_8 = arith.constant dense<0.000000e+00> : vector<8x32xf32>
    %24 = vector.multi_reduction <add>, %23, %cst_8 [1] : vector<8x8x32xf32> to vector<8x32xf32>
    %cst_9 = arith.constant 0.000000e+00 : f32
    %25 = vector.broadcast %cst_9 : f32 to vector<8x96xf32>
    %26 = tpu.concatenate %24, %25 in 1 : vector<8x32xf32>, vector<8x96xf32> -> vector<8x128xf32>
    %c0_10 = arith.constant 0 : index
    %c0_11 = arith.constant 0 : index
    %27 = vector.load %arg4[%c0_10, %c0_11] : memref<8x128xf32, #tpu.memory_space<vmem>>, vector<8x128xf32>
    tpu.vector_store %arg4[%c0_10, %c0_11], %26 {strides = array<i32>} : memref<8x128xf32, #tpu.memory_space<vmem>>, vector<8x128xf32>,
    %c0_12 = arith.constant 0 : index
    %c0_13 = arith.constant 0 : index
    %28 = vector.load %arg5[%c0_12, %c0_13] : memref<8x128xf32, #tpu.memory_space<vmem>>, vector<8x128xf32>
    tpu.vector_store %arg5[%c0_12, %c0_13], %19 {strides = array<i32>} : memref<8x128xf32, #tpu.memory_space<vmem>>, vector<8x128xf32>,
    return
  }
  func.func @transform_0(%arg0: i32) -> (i32, i32, i32) {
    %c0_i32 = arith.constant 0 : i32
    %c0_i32_0 = arith.constant 0 : i32
    %c0_i32_1 = arith.constant 0 : i32
    return %arg0, %c0_i32, %c0_i32_0 : i32, i32, i32
  }
  func.func @transform_1(%arg0: i32) -> (i32, i32) {
    %c0_i32 = arith.constant 0 : i32
    %c0_i32_0 = arith.constant 0 : i32
    %c0_i32_1 = arith.constant 0 : i32
    return %c0_i32, %c0_i32_0 : i32, i32
  }
  func.func @transform_2(%arg0: i32) -> i32 {
    %c0_i32 = arith.constant 0 : i32
    %c0_i32_0 = arith.constant 0 : i32
    return %c0_i32 : i32
  }
  func.func @transform_3(%arg0: i32) -> (i32, i32) {
    %c0_i32 = arith.constant 0 : i32
    %c0_i32_0 = arith.constant 0 : i32
    return %arg0, %c0_i32 : i32, i32
  }
  func.func @transform_4(%arg0: i32) -> (i32, i32) {
    %c0_i32 = arith.constant 0 : i32
    %c0_i32_0 = arith.constant 0 : i32
    return %arg0, %c0_i32 : i32, i32
  }
}

</mosaic_0001>

<llo_original>
// kernel: tpu_custom_call.1
$region0: #{tpu_custom_call.1}
  #allocation0 [shape = 'u32[]', space=smem, size = 0x4, offset = 0x4, fixed_abs, tag = 'smem constant byte address 0x4 - core index']
  #allocation1 [shape = 'u32[144,128]{1,0:T(1,128)}', space=vmem, size = 0x12000, scoped, tag = 'internal scratch']
  #allocation2 [shape = 'f32[1]{0:T(128)S(6)}', space=smem, size = 0x200, scoped, tag = 'scoped memory for tpu_custom_call.1']
  %s0 = inlined_call_operand.hbm [shape: f32[16,8,32], index: 0, kind: input, shape index: {}]
  %s1 = inlined_call_operand.vmem [shape: f32[1,32], index: 1, kind: input, shape index: {}]
  %s2 = inlined_call_operand.<no memory space> [shape: f32[1], index: 2, kind: input, shape index: {}]
  %s3 = inlined_call_operand.hbm [shape: f32[16,128], index: 3, kind: output, shape index: {0}]
  %s4 = inlined_call_operand.hbm [shape: f32[16,128], index: 4, kind: output, shape index: {1}]
  %5 = xla_tuple %s3, %s4
  %s6 = sld [smem:[#allocation0]]
  $region57: #{tpu_custom_call.1} parent=0
    _
  %s8 = ssub.s32 1, %s6
  %s9 = scalar_select 0, %s8, %s6
  %10 = sst [smem:[#allocation2]] %s2
  $region1: #{tpu_custom_call.1} parent=0
    #allocation3 [shape = 'u8[65536]{0}', space=vmem, size = 0x10000, scoped, tag = 'input window, operand 0']
    #allocation4 [shape = 's32[2]{0}', space=sflag, size = 0x8, scoped, tag = 'scoped memory for tpu_custom_call.1']
    #allocation5 [shape = 's32[2]{0}', space=sflag, size = 0x8, scoped, tag = 'scoped memory for tpu_custom_call.1']
    #allocation6 [shape = 'u8[8192]{0}', space=vmem, size = 0x2000, scoped, tag = 'output window, operand 0']
    #allocation7 [shape = 'u8[8192]{0}', space=vmem, size = 0x2000, scoped, tag = 'output window, operand 1']
    #allocation8 [shape = 's32[2]{0}', space=sflag, size = 0x8, scoped, tag = 'scoped memory for tpu_custom_call.1']
    %11 = vsyncpa [#allocation4], 0
    %s12 = scalar_lea.sflag [#allocation4], 1
    %13 = vsyncpa %s12, 0
    %14 = vsyncpa [#allocation5], 0
    %s15 = scalar_lea.sflag [#allocation5], 1
    %16 = vsyncpa %s15, 0
    %17 = vsyncpa [#allocation8], 0
    %s18 = scalar_lea.sflag [#allocation8], 1
    %19 = vsyncpa %s18, 0
    loop: start=0, step=1, limit=4
    $region2: #{tpu_custom_call.1} parent=1 // loop_pre_header
      _
    $region3: #{tpu_custom_call.1} parent=1 // loop_header
      %s21 = sphi 0, %s25
      %p22 = scmp.ge.s32.totalorder %s21, 4
      %s31 = sphi 0, %s33
      %s34 = sphi 0, %s31
      %s35 = sphi 0, %s34
      %s51 = sphi 0, %s35
      %s55 = sphi 0, %s55
      %s57 = sphi 0, %s55
      %s58 = sphi 0, %s57
      %s72 = sphi 0, %s58
      %s76 = sphi 0, %s76
      %s78 = sphi 0, %s76
      %s79 = sphi 0, %s78
      %s93 = sphi 0, %s79
      %s99 = sphi 0, %s101
      %s102 = sphi 0, %s99
      %s103 = sphi 0, %s102
      %s119 = sphi 0, %s103
      %s125 = sphi 0, %s127
      %s128 = sphi 0, %s125
      %s129 = sphi 0, %s128
      %s145 = sphi 0, %s129
    $region4: #{tpu_custom_call.1} parent=1 // loop_header_branch
      %24 = sbr.rel (%p22) target = $region8
    $region5: #{tpu_custom_call.1} parent=1 // loop_body
      %s26 = ssub.s32 %s21, 1
      %s27 = ssub.s32 %s21, 2
      %s28 = sadd.s32 %s21, 1
      %s29 = ssub.s32 %s21, %s28
      %p30 = scmp.eq.s32.totalorder %s29, 0
      %s32 = sadd.s32 %s31, 1
      %s33 = scalar_select %p30, %s31, %s32
      %p36 = pneg %p30
      %p37 = scmp.eq.s32.totalorder %s21, 1
      %p38 = por %p36, %p37
      %p39 = scmp.ne.s32.totalorder %s31, %s34
      %p40 = scmp.eq.s32.totalorder %s21, 0
      %p41 = por %p39, %p40
      %p42 = scmp.ne.s32.totalorder %s31, %s34
      %p43 = scmp.eq.s32.totalorder %s26, 1
      %p44 = por %p42, %p43
      %p45 = scmp.ne.s32.totalorder %s34, %s35
      %p46 = scmp.eq.s32.totalorder %s26, 0
      %p47 = por %p45, %p46
      %p48 = scmp.ne.s32.totalorder %s34, %s35
      %p49 = scmp.eq.s32.totalorder %s27, 1
      %p50 = por %p48, %p49
      %p52 = scmp.ne.s32.totalorder %s35, %s51
      %p53 = scmp.eq.s32.totalorder %s27, 0
      %p54 = por %p52, %p53
      %s56 = sadd.s32 %s55, 1
      %p59 = scmp.eq.s32.totalorder %s21, 1
      %p60 = scmp.ne.s32.totalorder %s55, %s57
      %p61 = scmp.eq.s32.totalorder %s21, 0
      %p62 = por %p60, %p61
      %p63 = scmp.ne.s32.totalorder %s55, %s57
      %p64 = scmp.eq.s32.totalorder %s26, 1
      %p65 = por %p63, %p64
      %p66 = scmp.ne.s32.totalorder %s57, %s58
      %p67 = scmp.eq.s32.totalorder %s26, 0
      %p68 = por %p66, %p67
      %p69 = scmp.ne.s32.totalorder %s57, %s58
      %p70 = scmp.eq.s32.totalorder %s27, 1
      %p71 = por %p69, %p70
      %p73 = scmp.ne.s32.totalorder %s58, %s72
      %p74 = scmp.eq.s32.totalorder %s27, 0
      %p75 = por %p73, %p74
      %s77 = sadd.s32 %s76, 1
      %p80 = scmp.eq.s32.totalorder %s21, 1
      %p81 = scmp.ne.s32.totalorder %s76, %s78
      %p82 = scmp.eq.s32.totalorder %s21, 0
      %p83 = por %p81, %p82
      %p84 = scmp.ne.s32.totalorder %s76, %s78
      %p85 = scmp.eq.s32.totalorder %s26, 1
      %p86 = por %p84, %p85
      %p87 = scmp.ne.s32.totalorder %s78, %s79
      %p88 = scmp.eq.s32.totalorder %s26, 0
      %p89 = por %p87, %p88
      %p90 = scmp.ne.s32.totalorder %s78, %s79
      %p91 = scmp.eq.s32.totalorder %s27, 1
      %p92 = por %p90, %p91
      %p94 = scmp.ne.s32.totalorder %s79, %s93
      %p95 = scmp.eq.s32.totalorder %s27, 0
      %p96 = por %p94, %p95
      %s97 = ssub.s32 %s21, %s28
      %p98 = scmp.eq.s32.totalorder %s97, 0
      %s100 = sadd.s32 %s99, 1
      %s101 = scalar_select %p98, %s99, %s100
      %p104 = pneg %p98
      %p105 = scmp.eq.s32.totalorder %s21, 1
      %p106 = por %p104, %p105
      %p107 = scmp.ne.s32.totalorder %s99, %s102
      %p108 = scmp.eq.s32.totalorder %s21, 0
      %p109 = por %p107, %p108
      %p110 = scmp.ne.s32.totalorder %s99, %s102
      %p111 = scmp.eq.s32.totalorder %s26, 1
      %p112 = por %p110, %p111
      %p113 = scmp.ne.s32.totalorder %s102, %s103
      %p114 = scmp.eq.s32.totalorder %s26, 0
      %p115 = por %p113, %p114
      %p116 = scmp.ne.s32.totalorder %s102, %s103
      %p117 = scmp.eq.s32.totalorder %s27, 1
      %p118 = por %p116, %p117
      %p120 = scmp.ne.s32.totalorder %s103, %s119
      %p121 = scmp.eq.s32.totalorder %s27, 0
      %p122 = por %p120, %p121
      %s123 = ssub.s32 %s21, %s28
      %p124 = scmp.eq.s32.totalorder %s123, 0
      %s126 = sadd.s32 %s125, 1
      %s127 = scalar_select %p124, %s125, %s126
      %p130 = pneg %p124
      %p131 = scmp.eq.s32.totalorder %s21, 1
      %p132 = por %p130, %p131
      %p133 = scmp.ne.s32.totalorder %s125, %s128
      %p134 = scmp.eq.s32.totalorder %s21, 0
      %p135 = por %p133, %p134
      %p136 = scmp.ne.s32.totalorder %s125, %s128
      %p137 = scmp.eq.s32.totalorder %s26, 1
      %p138 = por %p136, %p137
      %p139 = scmp.ne.s32.totalorder %s128, %s129
      %p140 = scmp.eq.s32.totalorder %s26, 0
      %p141 = por %p139, %p140
      %p142 = scmp.ne.s32.totalorder %s128, %s129
      %p143 = scmp.eq.s32.totalorder %s27, 1
      %p144 = por %p142, %p143
      %p146 = scmp.ne.s32.totalorder %s129, %s145
      %p147 = scmp.eq.s32.totalorder %s27, 0
      %p148 = por %p146, %p147
      %p149 = scmp.le.s32.totalorder 1, %s21
      %p150 = scmp.lt.s32.totalorder %s21, 3
      %p151 = pnand %p149, %p150
      %p152 = pneg %p151
      // Predicated region
      $region9: #{tpu_custom_call.1} parent=5 // pred_check
        _
      $region10: #{tpu_custom_call.1} parent=5 // pred_check_branch
        %154 = sbr.rel (%p151) target = $region12
      $region11: #{tpu_custom_call.1} parent=5 // pred_region
        %s155 = ssub.s32 %s21, 1
        // Predicated region
        $region13: #{tpu_custom_call.1} parent=11 // pred_check
          %p156 = pneg %p68
        $region14: #{tpu_custom_call.1} parent=11 // pred_check_branch
          %158 = sbr.rel (%p156) target = $region16
        $region15: #{tpu_custom_call.1} parent=11 // pred_region
          _
        $region16: #{tpu_custom_call.1} parent=11 // pred_fallthru
          _
        // Predicated region
        $region17: #{tpu_custom_call.1} parent=11 // pred_check
          %p159 = pneg %p89
        $region18: #{tpu_custom_call.1} parent=11 // pred_check_branch
          %161 = sbr.rel (%p159) target = $region20
        $region19: #{tpu_custom_call.1} parent=11 // pred_region
          _
        $region20: #{tpu_custom_call.1} parent=11 // pred_fallthru
          _
      $region12: #{tpu_custom_call.1} parent=5 // pred_fallthru
        _
      %p162 = scmp.lt.s32.totalorder %s21, 2
      // Predicated region
      $region21: #{tpu_custom_call.1} parent=5 // pred_check
        %p163 = pneg %p162
      $region22: #{tpu_custom_call.1} parent=5 // pred_check_branch
        %165 = sbr.rel (%p163) target = $region24
      $region23: #{tpu_custom_call.1} parent=5 // pred_region
        // Predicated region
        $region25: #{tpu_custom_call.1} parent=23 // pred_check
          %p166 = pneg %p41
        $region26: #{tpu_custom_call.1} parent=23 // pred_check_branch
          %168 = sbr.rel (%p166) target = $region28
        $region27: #{tpu_custom_call.1} parent=23 // pred_region
          %s169 = sand.u32 %s31, 1
          %s170 = scalar_lea.sflag [#allocation4], %s169
          %s171 = sand.u32 %s31, 1
          %s172 = smul.addr %s171, 64
          %s173 = scalar_lea.vmem [#allocation3], %s172
          %s174 = smul.u32 8, %s21
          %s176 = ssub.s32 1024, 1024
          %177 = vsyncadd %s170, %s176
          %s178 = smul.addr %s174, 128
          %s179 = scalar_lea.hbm %s0, %s178
          %s180 = sshll.u32 %s173, 4
          %s181 = int_to_ptr.vmem [resolvable:$true] %s180
          %186 = dma.hbm_to_vmem [thread:$0]  %s179, 1024, %s181, %s170, 128, 128, 8
        $region28: #{tpu_custom_call.1} parent=23 // pred_fallthru
          _
      $region24: #{tpu_custom_call.1} parent=5 // pred_fallthru
        _
      %p187 = scmp.le.s32.totalorder 1, %s21
      %p188 = scmp.lt.s32.totalorder %s21, 3
      %p189 = pnand %p187, %p188
      %p190 = pneg %p189
      // Predicated region
      $region29: #{tpu_custom_call.1} parent=5 // pred_check
        _
      $region30: #{tpu_custom_call.1} parent=5 // pred_check_branch
        %192 = sbr.rel (%p189) target = $region32
      $region31: #{tpu_custom_call.1} parent=5 // pred_region
        %s193 = ssub.s32 %s21, 1
        %s194 = sand.u32 %s34, 1
        %s195 = scalar_lea.sflag [#allocation4], %s194
        %s196 = sand.u32 %s34, 1
        %s197 = smul.addr %s196, 64
        %s198 = scalar_lea.vmem [#allocation3], %s197
        // Predicated region
        $region33: #{tpu_custom_call.1} parent=31 // pred_check
          %p199 = pneg %p47
        $region34: #{tpu_custom_call.1} parent=31 // pred_check_branch
          %201 = sbr.rel (%p199) target = $region36
        $region35: #{tpu_custom_call.1} parent=31 // pred_region
          %202 = dma.done %s195, 1024
        $region36: #{tpu_custom_call.1} parent=31 // pred_fallthru
          _
        %s203 = sand.u32 %s34, 1
        %s204 = scalar_lea.sflag [#allocation4], %s203
        %s205 = sand.u32 %s34, 1
        %s206 = smul.addr %s205, 64
        %s207 = scalar_lea.vmem [#allocation3], %s206
        %p208 = pneg %p47
        %p209 = pneg %p44
        %p210 = pneg %p68
        %p211 = pneg %p65
        %p212 = pneg %p89
        %p213 = pneg %p86
        %p214 = pneg %p115
        %p215 = pneg %p112
        %s216 = sand.u32 %s102, 1
        %s217 = scalar_lea.sflag [#allocation5], %s216
        %s218 = sand.u32 %s102, 1
        %s219 = smul.addr %s218, 8
        %s220 = scalar_lea.vmem [#allocation6], %s219
        %p221 = pneg %p141
        %p222 = pneg %p138
        %s223 = sand.u32 %s128, 1
        %s224 = scalar_lea.sflag [#allocation8], %s223
        %s225 = sand.u32 %s128, 1
        %s226 = smul.addr %s225, 8
        %s227 = scalar_lea.vmem [#allocation7], %s226
        %s228 = smul.u32 8, %s26
        %v229 = vld [vmem:[%s198] sm:$0xff]
        %v230 = vld [vmem:[%s198 + $0x8] sm:$0xff]
        %v231 = vld [vmem:[%s198 + $0x10] sm:$0xff]
        %v232 = vld [vmem:[%s198 + $0x18] sm:$0xff]
        %v233 = vld [vmem:[%s198 + $0x20] sm:$0xff]
        %v234 = vld [vmem:[%s198 + $0x28] sm:$0xff]
        %v235 = vld [vmem:[%s198 + $0x30] sm:$0xff]
        %v236 = vld [vmem:[%s198 + $0x38] sm:$0xff]
        %v237 = vtanh.pop %v229
        %v238 = vtanh.pop %v230
        %v239 = vtanh.pop %v231
        %v240 = vtanh.pop %v232
        %v241 = vtanh.pop %v233
        %v242 = vtanh.pop %v234
        %v243 = vtanh.pop %v235
        %v244 = vtanh.pop %v236
        %v245 = vld [vmem:[%s1] sm:$0x1]
        %v247 = vlaneseq
        %v248 = vshrl.u32 %v247, 7
        %v249 = vsub.s32 0, %v248
        %v250 = vrot.slane %v245, %v249
        %v252 = vmul.f32 %v237, %v250
        %v253 = vmul.f32 %v238, %v250
        %v254 = vmul.f32 %v239, %v250
        %v255 = vmul.f32 %v240, %v250
        %v256 = vmul.f32 %v241, %v250
        %v257 = vmul.f32 %v242, %v250
        %v258 = vmul.f32 %v243, %v250
        %v259 = vmul.f32 %v244, %v250
        %vm260 = vcmask 261120
        %v261 = vsel %vm260, %v252, 0.0
        %262 = vadd.xlane.f32.xlu0 %v261
        %v263 = vpop.xlane.xlu0 %262
        %v264 = vsel %vm260, %v253, 0.0
        %265 = vadd.xlane.f32.xlu0 %v264
        %v266 = vpop.xlane.xlu0 %265
        %v267 = vsel %vm260, %v254, 0.0
        %268 = vadd.xlane.f32.xlu0 %v267
        %v269 = vpop.xlane.xlu0 %268
        %v270 = vsel %vm260, %v255, 0.0
        %271 = vadd.xlane.f32.xlu0 %v270
        %v272 = vpop.xlane.xlu0 %271
        %v273 = vsel %vm260, %v256, 0.0
        %274 = vadd.xlane.f32.xlu0 %v273
        %v275 = vpop.xlane.xlu0 %274
        %v276 = vsel %vm260, %v257, 0.0
        %277 = vadd.xlane.f32.xlu0 %v276
        %v278 = vpop.xlane.xlu0 %277
        %v279 = vsel %vm260, %v258, 0.0
        %280 = vadd.xlane.f32.xlu0 %v279
        %v281 = vpop.xlane.xlu0 %280
        %v282 = vsel %vm260, %v259, 0.0
        %283 = vadd.xlane.f32.xlu0 %v282
        %v284 = vpop.xlane.xlu0 %283
        %s285 = sld [smem:[#allocation2]]
        %v286 = vstv %s285
        %v287 = vadd.f32 %v263, %v286
        %v288 = vadd.f32 %v266, %v286
        %v289 = vadd.f32 %v269, %v286
        %v290 = vadd.f32 %v272, %v286
        %v291 = vadd.f32 %v275, %v286
        %v292 = vadd.f32 %v278, %v286
        %v293 = vadd.f32 %v281, %v286
        %v294 = vadd.f32 %v284, %v286
        %v303 = vlaneseq
        %v304 = vand.u32 %v303, 127
        %v305 = vlaneseq
        %v306 = vshrl.u32 %v305, 7
        %v307 = vsub.s32 %v304, %v306
        %v308 = vrot.slane %v287, %v307
        %v309 = vlaneseq
        %v310 = vshrl.u32 %v309, 7
        %v311 = vsub.s32 %v304, %v310
        %v312 = vrot.slane %v288, %v311
        %v313 = vlaneseq
        %v314 = vshrl.u32 %v313, 7
        %v315 = vsub.s32 %v304, %v314
        %v316 = vrot.slane %v289, %v315
        %v317 = vlaneseq
        %v318 = vshrl.u32 %v317, 7
        %v319 = vsub.s32 %v304, %v318
        %v320 = vrot.slane %v290, %v319
        %v321 = vlaneseq
        %v322 = vshrl.u32 %v321, 7
        %v323 = vsub.s32 %v304, %v322
        %v324 = vrot.slane %v291, %v323
        %v325 = vlaneseq
        %v326 = vshrl.u32 %v325, 7
        %v327 = vsub.s32 %v304, %v326
        %v328 = vrot.slane %v292, %v327
        %v329 = vlaneseq
        %v330 = vshrl.u32 %v329, 7
        %v331 = vsub.s32 %v304, %v330
        %v332 = vrot.slane %v293, %v331
        %v333 = vlaneseq
        %v334 = vshrl.u32 %v333, 7
        %v335 = vsub.s32 %v304, %v334
        %v336 = vrot.slane %v294, %v335
        %vm337 = vcmask 1041409
        %v338 = vsel %vm337, %v312, %v308
        %vm339 = vcmask 1042434
        %v340 = vsel %vm339, %v316, %v338
        %vm341 = vcmask 1043459
        %v342 = vsel %vm341, %v320, %v340
        %vm343 = vcmask 1044484
        %v344 = vsel %vm343, %v324, %v342
        %vm345 = vcmask 1045509
        %v346 = vsel %vm345, %v328, %v344
        %vm347 = vcmask 1046534
        %v348 = vsel %vm347, %v332, %v346
        %vm349 = vcmask 1047559
        %v350 = vsel %vm349, %v336, %v348
        %vm352 = vcmask 64512
        %v353 = vsel %vm352, %v350, -1e+30
        %354 = vmax.xlane.f32.xlu0 %v353
        %v355 = vpop.xlane.xlu0 %354
        %v356 = vsub.f32 %v353, %v355
        %v357 = vmul.f32 %v356, 1.442695
        %v358 = vpow.pop %v357
        %359 = vadd.xlane.f32.xlu0 %v358
        %v360 = vpop.xlane.xlu0 %359
        %v361 = vrcp.pop %v360
        %v362 = vmul.f32 %v358, %v361
        %v363 = vlaneseq
        %v364 = vshrl.u32 %v363, 7
        %v365 = vsub.s32 0, %v364
        %v366 = vrot.slane %v362, %v365
        %368 = vbcast.lane.b32.xlu0 %v366, 256
        %v369 = vpop.permute.xlu0 %368
        %v370 = vlaneseq
        %v371 = vshrl.u32 %v370, 7
        %v372 = vsub.s32 1, %v371
        %v373 = vrot.slane %v362, %v372
        %375 = vbcast.lane.b32.xlu0 %v373, 256
        %v376 = vpop.permute.xlu0 %375
        %v377 = vlaneseq
        %v378 = vshrl.u32 %v377, 7
        %v379 = vsub.s32 2, %v378
        %v380 = vrot.slane %v362, %v379
        %382 = vbcast.lane.b32.xlu0 %v380, 256
        %v383 = vpop.permute.xlu0 %382
        %v384 = vlaneseq
        %v385 = vshrl.u32 %v384, 7
        %v386 = vsub.s32 3, %v385
        %v387 = vrot.slane %v362, %v386
        %389 = vbcast.lane.b32.xlu0 %v387, 256
        %v390 = vpop.permute.xlu0 %389
        %v391 = vlaneseq
        %v392 = vshrl.u32 %v391, 7
        %v393 = vsub.s32 4, %v392
        %v394 = vrot.slane %v362, %v393
        %396 = vbcast.lane.b32.xlu0 %v394, 256
        %v397 = vpop.permute.xlu0 %396
        %v398 = vlaneseq
        %v399 = vshrl.u32 %v398, 7
        %v400 = vsub.s32 5, %v399
        %v401 = vrot.slane %v362, %v400
        %403 = vbcast.lane.b32.xlu0 %v401, 256
        %v404 = vpop.permute.xlu0 %403
        %v405 = vlaneseq
        %v406 = vshrl.u32 %v405, 7
        %v407 = vsub.s32 6, %v406
        %v408 = vrot.slane %v362, %v407
        %410 = vbcast.lane.b32.xlu0 %v408, 256
        %v411 = vpop.permute.xlu0 %410
        %v412 = vlaneseq
        %v413 = vshrl.u32 %v412, 7
        %v414 = vsub.s32 7, %v413
        %v415 = vrot.slane %v362, %v414
        %417 = vbcast.lane.b32.xlu0 %v415, 256
        %v418 = vpop.permute.xlu0 %417
        %v419 = vmul.f32 %v229, %v369
        %v420 = vmul.f32 %v230, %v376
        %v421 = vmul.f32 %v231, %v383
        %v422 = vmul.f32 %v232, %v390
        %v423 = vmul.f32 %v233, %v397
        %v424 = vmul.f32 %v234, %v404
        %v425 = vmul.f32 %v235, %v411
        %v426 = vmul.f32 %v236, %v418
        %v427 = vsel %vm260, %v419, 0.0
        %v428 = vrot.slane %v427, 4
        %v429 = vadd.f32 %v427, %v428
        %v430 = vrot.slane %v429, 2
        %v431 = vadd.f32 %v429, %v430
        %v432 = vrot.slane %v431, 1
        %v433 = vadd.f32 %v431, %v432
        %v434 = vsel %vm260, %v420, 0.0
        %v435 = vrot.slane %v434, 4
        %v436 = vadd.f32 %v434, %v435
        %v437 = vrot.slane %v436, 2
        %v438 = vadd.f32 %v436, %v437
        %v439 = vrot.slane %v438, 1
        %v440 = vadd.f32 %v438, %v439
        %v441 = vsel %vm260, %v421, 0.0
        %v442 = vrot.slane %v441, 4
        %v443 = vadd.f32 %v441, %v442
        %v444 = vrot.slane %v443, 2
        %v445 = vadd.f32 %v443, %v444
        %v446 = vrot.slane %v445, 1
        %v447 = vadd.f32 %v445, %v446
        %v448 = vsel %vm260, %v422, 0.0
        %v449 = vrot.slane %v448, 4
        %v450 = vadd.f32 %v448, %v449
        %v451 = vrot.slane %v450, 2
        %v452 = vadd.f32 %v450, %v451
        %v453 = vrot.slane %v452, 1
        %v454 = vadd.f32 %v452, %v453
        %v455 = vsel %vm260, %v423, 0.0
        %v456 = vrot.slane %v455, 4
        %v457 = vadd.f32 %v455, %v456
        %v458 = vrot.slane %v457, 2
        %v459 = vadd.f32 %v457, %v458
        %v460 = vrot.slane %v459, 1
        %v461 = vadd.f32 %v459, %v460
        %v462 = vsel %vm260, %v424, 0.0
        %v463 = vrot.slane %v462, 4
        %v464 = vadd.f32 %v462, %v463
        %v465 = vrot.slane %v464, 2
        %v466 = vadd.f32 %v464, %v465
        %v467 = vrot.slane %v466, 1
        %v468 = vadd.f32 %v466, %v467
        %v469 = vsel %vm260, %v425, 0.0
        %v470 = vrot.slane %v469, 4
        %v471 = vadd.f32 %v469, %v470
        %v472 = vrot.slane %v471, 2
        %v473 = vadd.f32 %v471, %v472
        %v474 = vrot.slane %v473, 1
        %v475 = vadd.f32 %v473, %v474
        %v476 = vsel %vm260, %v426, 0.0
        %v477 = vrot.slane %v476, 4
        %v478 = vadd.f32 %v476, %v477
        %v479 = vrot.slane %v478, 2
        %v480 = vadd.f32 %v478, %v479
        %v481 = vrot.slane %v480, 1
        %v482 = vadd.f32 %v480, %v481
        %v491 = vsel %vm337, %v440, %v433
        %v492 = vsel %vm339, %v447, %v491
        %v493 = vsel %vm341, %v454, %v492
        %v494 = vsel %vm343, %v461, %v493
        %v495 = vsel %vm345, %v468, %v494
        %v496 = vsel %vm347, %v475, %v495
        %v497 = vsel %vm349, %v482, %v496
        %v499 = vsel %vm260, %v497, 0.0
        %500 = vst [vmem:[%s220] sm:$0xff] %v499
        %501 = vst [vmem:[%s227] sm:$0xff] %v362
        %s502 = sand.u32 %s102, 1
        %s503 = scalar_lea.sflag [#allocation5], %s502
        %s504 = sand.u32 %s102, 1
        %s505 = smul.addr %s504, 8
        %s506 = scalar_lea.vmem [#allocation6], %s505
        %s507 = sand.u32 %s128, 1
        %s508 = scalar_lea.sflag [#allocation8], %s507
        %s509 = sand.u32 %s128, 1
        %s510 = smul.addr %s509, 8
        %s511 = scalar_lea.vmem [#allocation7], %s510
        // Predicated region
        $region37: #{tpu_custom_call.1} parent=31 // pred_check
          %p512 = pneg %p112
        $region38: #{tpu_custom_call.1} parent=31 // pred_check_branch
          %514 = sbr.rel (%p512) target = $region40
        $region39: #{tpu_custom_call.1} parent=31 // pred_region
          %s516 = ssub.s32 128, 128
          %517 = vsyncadd %s503, %s516
          %s518 = smul.addr %s26, 128
          %s519 = scalar_lea.hbm %s3, %s518
          %s521 = sshll.u32 %s506, 4
          %s522 = int_to_ptr.vmem [resolvable:$true] %s521
          %524 = dma.vmem_to_hbm [thread:$0]  %s522, 128, %s519, %s503
        $region40: #{tpu_custom_call.1} parent=31 // pred_fallthru
          _
        // Predicated region
        $region41: #{tpu_custom_call.1} parent=31 // pred_check
          %p525 = pneg %p138
        $region42: #{tpu_custom_call.1} parent=31 // pred_check_branch
          %527 = sbr.rel (%p525) target = $region44
        $region43: #{tpu_custom_call.1} parent=31 // pred_region
          %s529 = ssub.s32 128, 128
          %530 = vsyncadd %s508, %s529
          %s531 = smul.addr %s26, 128
          %s532 = scalar_lea.hbm %s4, %s531
          %s534 = sshll.u32 %s511, 4
          %s535 = int_to_ptr.vmem [resolvable:$true] %s534
          %537 = dma.vmem_to_hbm [thread:$0]  %s535, 128, %s532, %s508
        $region44: #{tpu_custom_call.1} parent=31 // pred_fallthru
          _
      $region32: #{tpu_custom_call.1} parent=5 // pred_fallthru
        _
      %p538 = scmp.le.s32.totalorder 2, %s21
      // Predicated region
      $region45: #{tpu_custom_call.1} parent=5 // pred_check
        %p539 = pneg %p538
      $region46: #{tpu_custom_call.1} parent=5 // pred_check_branch
        %541 = sbr.rel (%p539) target = $region48
      $region47: #{tpu_custom_call.1} parent=5 // pred_region
        %s542 = ssub.s32 %s21, 2
        // Predicated region
        $region49: #{tpu_custom_call.1} parent=47 // pred_check
          %p543 = pneg %p118
        $region50: #{tpu_custom_call.1} parent=47 // pred_check_branch
          %545 = sbr.rel (%p543) target = $region52
        $region51: #{tpu_custom_call.1} parent=47 // pred_region
          %s546 = sand.u32 %s103, 1
          %s547 = scalar_lea.sflag [#allocation5], %s546
          %s548 = sand.u32 %s103, 1
          %s549 = smul.addr %s548, 8
          %s550 = scalar_lea.vmem [#allocation6], %s549
          %551 = dma.done %s547, 128
        $region52: #{tpu_custom_call.1} parent=47 // pred_fallthru
          _
        // Predicated region
        $region53: #{tpu_custom_call.1} parent=47 // pred_check
          %p552 = pneg %p144
        $region54: #{tpu_custom_call.1} parent=47 // pred_check_branch
          %554 = sbr.rel (%p552) target = $region56
        $region55: #{tpu_custom_call.1} parent=47 // pred_region
          %s555 = sand.u32 %s129, 1
          %s556 = scalar_lea.sflag [#allocation8], %s555
          %s557 = sand.u32 %s129, 1
          %s558 = smul.addr %s557, 8
          %s559 = scalar_lea.vmem [#allocation7], %s558
          %560 = dma.done %s556, 128
        $region56: #{tpu_custom_call.1} parent=47 // pred_fallthru
          _
      $region48: #{tpu_custom_call.1} parent=5 // pred_fallthru
        _
    $region6: #{tpu_custom_call.1} parent=1 // loop_footer
      %s25 = sadd.s32 1, %s21
    $region7: #{tpu_custom_call.1} parent=1 // loop_footer_branch
      %20 = sbr.rel target = $region3
    $region8: #{tpu_custom_call.1} parent=1 // loop_exit
      _
    %561 = vsyncpa [#allocation4], 1
    %s562 = scalar_lea.sflag [#allocation4], 1
    %563 = vsyncpa %s562, 1
    %564 = vsyncpa [#allocation5], 1
    %s565 = scalar_lea.sflag [#allocation5], 1
    %566 = vsyncpa %s565, 1
    %567 = vsyncpa [#allocation8], 1
    %s568 = scalar_lea.sflag [#allocation8], 1
    %569 = vsyncpa %s568, 1

</llo_original>
